<compile_context>
chip_gen: v6e
topology: v6e:2x2x1
jax: 0.10.0
libtpu: 0.0.40
codegen_flags: <defaults>
</compile_context>

<pallas_src>
import functools

import jax
import jax.numpy as jnp
from jax.experimental import pallas as pl
from jax.experimental.pallas import tpu as pltpu

EPS = 1e-5


# ---------------------------------- Pallas kernel -----------------------------------
def _block_kernel(x_ref, w1_ref, b1_ref, w2_ref, b2_ref, o_ref, y1_ref,
                  *, KH, KW, W, H, PH, NB):
    """Fused conv+BN+ReLU x2 on NB row-flattened images (spatial on lanes).

    x_ref:   (NB, Cin, Lp_in)  bf16, height-padded + flat tail, Lp_in=(H+2*PH+1)*W
    w*_ref:  (Cout, KH*KW*Cin) bf16, BN scale folded in
    b*_ref:  (Cout, 1)         f32 folded BN shift (+conv bias)
    o_ref:   (NB, Cout, M)     f32, M=H*W; cols >= W-2*(KW-1) of each row are garbage
    y1_ref:  (NB, Cmid, Lp_mid) bf16 scratch — conv1 output with zero height halo
    """
    M = H * W
    CMID = y1_ref.shape[1]
    LP_MID = y1_ref.shape[2]
    top = PH * W
    bot = LP_MID - (top + M)

    def gather_patch(read_img):
        # Build (KH*KW*C, NB*M) bf16 patch: all taps folded into the contraction dim.
        imgs = [read_img(b) for b in range(NB)]            # each (C, Lp) value, loaded once
        taps = []
        for dh in range(KH):
            for dw in range(KW):
                off = dh * W + dw                          # static lane offset
                cols = [img[:, off:off + M] for img in imgs]
                taps.append(cols[0] if NB == 1 else jnp.concatenate(cols, axis=-1))
        return jnp.concatenate(taps, axis=0)

    # ---------------- conv1 + BN1 + ReLU: one bf16 MXU dot, f32 accumulate ------------
    patch1 = gather_patch(lambda b: x_ref[b])                            # (K1, NB*M)
    r1 = jnp.dot(w1_ref[...], patch1, preferred_element_type=jnp.float32)  # (Cmid, NB*M)
    y1 = jnp.maximum(r1 + b1_ref[...], 0.0).astype(jnp.bfloat16)

    # Stage intermediate in VMEM with zero height-halo lanes (conv2's H padding).
    # Zero only the tiny halo slices (not the whole buffer), every step.
    for b in range(NB):
        y1_ref[b, :, 0:top] = jnp.zeros((CMID, top), jnp.bfloat16)
        y1_ref[b, :, top + M:LP_MID] = jnp.zeros((CMID, bot), jnp.bfloat16)
        y1_ref[b, :, top:top + M] = y1[:, b * M:(b + 1) * M]

    # ---------------- conv2 + BN2 + ReLU on the VMEM-resident intermediate ------------
    patch2 = gather_patch(lambda b: y1_ref[b])                           # (K2, NB*M)
    r2 = jnp.dot(w2_ref[...], patch2, preferred_element_type=jnp.float32)  # (Cout, NB*M)
    y2 = jnp.maximum(r2 + b2_ref[...], 0.0)
    for b in range(NB):
        o_ref[b] = y2[:, b * M:(b + 1) * M].astype(o_ref.dtype)


# ------------------------------------- wrapper --------------------------------------
def down_unet2d_block(params, x_nchw, *, kernel_size=3):
    """Matches _DownUnet2DBlock.forward (BN in inference mode). x_nchw: (N, Cin, H, W)."""
    (w1, s1, b1), (w2, s2, b2) = params
    kh, kw = kernel_size, 3
    ph = kh // 2
    n, cin, h, w = x_nchw.shape
    cmid, cout = w1.shape[-1], w2.shape[-1]
    assert w >= 2 * (kw - 1) + 1, "width too small for the row-wrap scheme"

    m = h * w
    hp = h + 2 * ph
    lp_in = (hp + 1) * w               # merged pad: ph rows top, ph+1 rows bottom (>= flat tail)
    lp_mid = hp * w + (kw - 1)

    # Single wrapper pass over the input: bf16 cast + height pad + spatial flatten.
    xf = jnp.pad(x_nchw.astype(jnp.bfloat16), ((0, 0), (0, 0), (ph, ph + 1), (0, 0)))
    xf = xf.reshape(n, cin, lp_in)

    # Fold BN scale into the bf16 weights and reshape to (Cout, KH*KW*Cin) — one dot/conv.
    w1m = (w1 * s1).reshape(kh * kw * cin, cmid).T.astype(jnp.bfloat16)
    w2m = (w2 * s2).reshape(kh * kw * cmid, cout).T.astype(jnp.bfloat16)
    b1c = b1.reshape(cmid, 1).astype(jnp.float32)
    b2c = b2.reshape(cout, 1).astype(jnp.float32)

    # Batch folding: nb images per grid step (lane-concatenated into one fat matmul).
    # Keep >= 2 grid steps when possible so v7x's two TensorCores both get work.
    if n % 2 == 0:
        nb = min(4, n // 2)
        while n % nb:
            nb -= 1
    else:
        nb = 1
    n_steps = n // nb

    kernel = functools.partial(_block_kernel, KH=kh, KW=kw, W=w, H=h, PH=ph, NB=nb)
    out = pl.pallas_call(
        kernel,
        out_shape=jax.ShapeDtypeStruct((n, cout, m), jnp.float32),
        grid=(n_steps,),
        in_specs=[
            pl.BlockSpec((nb, cin, lp_in), lambda i: (i, 0, 0)),
            pl.BlockSpec((cmid, kh * kw * cin), lambda i: (0, 0)),
            pl.BlockSpec((cmid, 1), lambda i: (0, 0)),
            pl.BlockSpec((cout, kh * kw * cmid), lambda i: (0, 0)),
            pl.BlockSpec((cout, 1), lambda i: (0, 0)),
        ],
        out_specs=pl.BlockSpec((nb, cout, m), lambda i: (i, 0, 0)),
        scratch_shapes=[
            pltpu.VMEM((nb, cmid, lp_mid), jnp.bfloat16),   # conv1 output + zero height halo
        ],
        compiler_params=pltpu.CompilerParams(dimension_semantics=("parallel",)),
    )(xf, w1m, b1c, w2m, b2c)

    wo = w - 2 * (kw - 1)                                   # width after two valid (·,3) convs
    return out.reshape(n, cout, h, w)[:, :, :, :wo]          # drop wrap-garbage columns (NCHW)


# --------------------------------- parameter init -----------------------------------
def init_params(key, *, initial_filters, end_filters, kernel_size, in_middle_filters=None):
    mid = end_filters if in_middle_filters is None else in_middle_filters
    keys = jax.random.split(key, 8)

    def conv_bn(kw_, kb_, kg_, kbe_, kh, kw, cin, cout):
        fan_in = kh * kw * cin
        wgt = (1.0 / fan_in) ** 0.5 * jax.random.normal(kw_, (kh, kw, cin, cout), jnp.float32)
        bias = 0.05 * jax.random.normal(kb_, (cout,), jnp.float32)
        gamma = 1.0 + 0.05 * jax.random.normal(kg_, (cout,), jnp.float32)
        beta = 0.05 * jax.random.normal(kbe_, (cout,), jnp.float32)
        # BatchNorm (inference, running mean=0 / var=1) folded with the conv bias.
        scale = gamma / jnp.sqrt(1.0 + EPS)
        shift = beta + bias * scale
        return wgt, scale, shift

    c1 = conv_bn(keys[0], keys[1], keys[2], keys[3], kernel_size, 3, initial_filters, mid)
    c2 = conv_bn(keys[4], keys[5], keys[6], keys[7], kernel_size, 3, mid, end_filters)
    return c1, c2


# -------------------------------- plain-JAX reference -------------------------------
def _reference(params, x_nchw, *, kernel_size=3):
    (w1, s1, b1), (w2, s2, b2) = params
    ph = kernel_size // 2
    dn = ("NHWC", "HWIO", "NHWC")
    y = jnp.transpose(x_nchw, (0, 2, 3, 1)).astype(jnp.float32)
    y = jax.lax.conv_general_dilated(y, w1, (1, 1), [(ph, ph), (0, 0)], dimension_numbers=dn)
    y = jnp.maximum(y * s1 + b1, 0.0)
    y = jax.lax.conv_general_dilated(y, w2, (1, 1), [(ph, ph), (0, 0)], dimension_numbers=dn)
    y = jnp.maximum(y * s2 + b2, 0.0)
    return jnp.transpose(y, (0, 3, 1, 2))


# --------------------------------------- main ---------------------------------------
if __name__ == "__main__":
    key = jax.random.PRNGKey(0)
    pkey, xkey = jax.random.split(key)

    N, C_IN, H, W = 2, 8, 16, 16
    C_END, KSIZE = 16, 3

    params = init_params(pkey, initial_filters=C_IN, end_filters=C_END, kernel_size=KSIZE)
    x = jax.random.normal(xkey, (N, C_IN, H, W), jnp.float32)

    fwd = jax.jit(functools.partial(down_unet2d_block, kernel_size=KSIZE))
    y = fwd(params, x)
    jax.block_until_ready(y)

    assert y.shape == (N, C_END, H, W - 4), y.shape
    assert bool(jnp.all(jnp.isfinite(y)))

    # Cross-check against a plain-JAX f32 reference (bf16 MXU operands => loose tolerance).
    y_ref = _reference(params, x, kernel_size=KSIZE)
    err = float(jnp.max(jnp.abs(y - y_ref)))
    assert err < 0.15, err

    print("KERNEL_OK")
</pallas_src>

<mosaic_0001>
module attributes {stable_mosaic.version = 11 : i64} {
  func.func @_block_kernel(%arg0: i32, %arg1: memref<1x8x304xbf16, #tpu.memory_space<vmem>>, %arg2: memref<16x72xbf16, #tpu.memory_space<vmem>>, %arg3: memref<16x1xf32, #tpu.memory_space<vmem>>, %arg4: memref<16x144xbf16, #tpu.memory_space<vmem>>, %arg5: memref<16x1xf32, #tpu.memory_space<vmem>>, %arg6: memref<1x16x256xf32, #tpu.memory_space<vmem>>, %arg7: memref<1x16x290xbf16, #tpu.memory_space<vmem>>) attributes {dimension_semantics = [#tpu.dimension_semantics<parallel>], iteration_bounds = array<i64: 2>, scalar_prefetch = 0 : i64, scratch_operands = 1 : i64, tpu.core_type = #tpu.core_type<tc>, window_params = [{transform_indices = @transform_0, window_bounds = array<i64: 1, 8, 304>}, {pipeline_mode = #tpu.pipeline_mode<synchronous>, transform_indices = @transform_1, window_bounds = array<i64: 16, 72>}, {pipeline_mode = #tpu.pipeline_mode<synchronous>, transform_indices = @transform_2, window_bounds = array<i64: 16, 1>}, {pipeline_mode = #tpu.pipeline_mode<synchronous>, transform_indices = @transform_3, window_bounds = array<i64: 16, 144>}, {pipeline_mode = #tpu.pipeline_mode<synchronous>, transform_indices = @transform_4, window_bounds = array<i64: 16, 1>}, {transform_indices = @transform_5, window_bounds = array<i64: 1, 16, 256>}]} {
    %c0 = arith.constant 0 : index
    %c0_0 = arith.constant 0 : index
    %c0_1 = arith.constant 0 : index
    %0 = vector.load %arg1[%c0, %c0_0, %c0_1] : memref<1x8x304xbf16, #tpu.memory_space<vmem>>, vector<1x8x304xbf16>
    %1 = vector.shape_cast %0 : vector<1x8x304xbf16> to vector<8x304xbf16>
    %2 = vector.extract_strided_slice %1 {offsets = [0, 0], sizes = [8, 256], strides = [1, 1]} : vector<8x304xbf16> to vector<8x256xbf16>
    %3 = vector.extract_strided_slice %1 {offsets = [0, 1], sizes = [8, 256], strides = [1, 1]} : vector<8x304xbf16> to vector<8x256xbf16>
    %4 = vector.extract_strided_slice %1 {offsets = [0, 2], sizes = [8, 256], strides = [1, 1]} : vector<8x304xbf16> to vector<8x256xbf16>
    %5 = vector.extract_strided_slice %1 {offsets = [0, 16], sizes = [8, 256], strides = [1, 1]} : vector<8x304xbf16> to vector<8x256xbf16>
    %6 = vector.extract_strided_slice %1 {offsets = [0, 17], sizes = [8, 256], strides = [1, 1]} : vector<8x304xbf16> to vector<8x256xbf16>
    %7 = vector.extract_strided_slice %1 {offsets = [0, 18], sizes = [8, 256], strides = [1, 1]} : vector<8x304xbf16> to vector<8x256xbf16>
    %8 = vector.extract_strided_slice %1 {offsets = [0, 32], sizes = [8, 256], strides = [1, 1]} : vector<8x304xbf16> to vector<8x256xbf16>
    %9 = vector.extract_strided_slice %1 {offsets = [0, 33], sizes = [8, 256], strides = [1, 1]} : vector<8x304xbf16> to vector<8x256xbf16>
    %10 = vector.extract_strided_slice %1 {offsets = [0, 34], sizes = [8, 256], strides = [1, 1]} : vector<8x304xbf16> to vector<8x256xbf16>
    %11 = tpu.concatenate %2, %3, %4, %5, %6, %7, %8, %9, %10 in 0 : vector<8x256xbf16>, vector<8x256xbf16>, vector<8x256xbf16>, vector<8x256xbf16>, vector<8x256xbf16>, vector<8x256xbf16>, vector<8x256xbf16>, vector<8x256xbf16>, vector<8x256xbf16> -> vector<72x256xbf16>
    %c0_2 = arith.constant 0 : index
    %c0_3 = arith.constant 0 : index
    %12 = vector.load %arg2[%c0_2, %c0_3] : memref<16x72xbf16, #tpu.memory_space<vmem>>, vector<16x72xbf16>
    %cst = arith.constant dense<0.000000e+00> : vector<16x256xf32>
    %13 = tpu.matmul %12, %11, %cst {dimension_numbers = #tpu.dot_dimension_numbers<[1], [0], [0], [1], [0, 0, 1, 1], [], []>} : vector<16x72xbf16>, vector<72x256xbf16>, vector<16x256xf32> -> vector<16x256xf32>
    %c0_4 = arith.constant 0 : index
    %c0_5 = arith.constant 0 : index
    %14 = vector.load %arg3[%c0_4, %c0_5] : memref<16x1xf32, #tpu.memory_space<vmem>>, vector<16x1xf32>
    %15 = vector.broadcast %14 : vector<16x1xf32> to vector<16x256xf32>
    %16 = arith.addf %13, %15 : vector<16x256xf32>
    %cst_6 = arith.constant 0.000000e+00 : f32
    %17 = vector.broadcast %cst_6 : f32 to vector<16x256xf32>
    %18 = arith.maximumf %16, %17 : vector<16x256xf32>
    %19 = arith.truncf %18 : vector<16x256xf32> to vector<16x256xbf16>
    %cst_7 = arith.constant 0.000000e+00 : bf16
    %20 = vector.broadcast %cst_7 : bf16 to vector<16x16xbf16>
    %c0_8 = arith.constant 0 : index
    %c0_9 = arith.constant 0 : index
    %c0_10 = arith.constant 0 : index
    %21 = vector.load %arg7[%c0_8, %c0_9, %c0_10] : memref<1x16x290xbf16, #tpu.memory_space<vmem>>, vector<1x16x16xbf16>
    %22 = vector.shape_cast %21 : vector<1x16x16xbf16> to vector<16x16xbf16>
    %23 = vector.shape_cast %20 : vector<16x16xbf16> to vector<1x16x16xbf16>
    tpu.vector_store %arg7[%c0_8, %c0_9, %c0_10], %23 {strides = array<i32>} : memref<1x16x290xbf16, #tpu.memory_space<vmem>>, vector<1x16x16xbf16>,
    %cst_11 = arith.constant 0.000000e+00 : bf16
    %24 = vector.broadcast %cst_11 : bf16 to vector<16x18xbf16>
    %c0_12 = arith.constant 0 : index
    %c0_13 = arith.constant 0 : index
    %c272 = arith.constant 272 : index
    %25 = vector.load %arg7[%c0_12, %c0_13, %c272] : memref<1x16x290xbf16, #tpu.memory_space<vmem>>, vector<1x16x18xbf16>
    %26 = vector.shape_cast %25 : vector<1x16x18xbf16> to vector<16x18xbf16>
    %27 = vector.shape_cast %24 : vector<16x18xbf16> to vector<1x16x18xbf16>
    tpu.vector_store %arg7[%c0_12, %c0_13, %c272], %27 {strides = array<i32>} : memref<1x16x290xbf16, #tpu.memory_space<vmem>>, vector<1x16x18xbf16>,
    %c0_14 = arith.constant 0 : index
    %c0_15 = arith.constant 0 : index
    %c16 = arith.constant 16 : index
    %28 = vector.load %arg7[%c0_14, %c0_15, %c16] : memref<1x16x290xbf16, #tpu.memory_space<vmem>>, vector<1x16x256xbf16>
    %29 = vector.shape_cast %28 : vector<1x16x256xbf16> to vector<16x256xbf16>
    %30 = vector.shape_cast %19 : vector<16x256xbf16> to vector<1x16x256xbf16>
    tpu.vector_store %arg7[%c0_14, %c0_15, %c16], %30 {strides = array<i32>} : memref<1x16x290xbf16, #tpu.memory_space<vmem>>, vector<1x16x256xbf16>,
    %c0_16 = arith.constant 0 : index
    %c0_17 = arith.constant 0 : index
    %c0_18 = arith.constant 0 : index
    %31 = vector.load %arg7[%c0_16, %c0_17, %c0_18] : memref<1x16x290xbf16, #tpu.memory_space<vmem>>, vector<1x16x290xbf16>
    %32 = vector.shape_cast %31 : vector<1x16x290xbf16> to vector<16x290xbf16>
    %33 = vector.extract_strided_slice %32 {offsets = [0, 0], sizes = [16, 256], strides = [1, 1]} : vector<16x290xbf16> to vector<16x256xbf16>
    %34 = vector.extract_strided_slice %32 {offsets = [0, 1], sizes = [16, 256], strides = [1, 1]} : vector<16x290xbf16> to vector<16x256xbf16>
    %35 = vector.extract_strided_slice %32 {offsets = [0, 2], sizes = [16, 256], strides = [1, 1]} : vector<16x290xbf16> to vector<16x256xbf16>
    %36 = vector.extract_strided_slice %32 {offsets = [0, 16], sizes = [16, 256], strides = [1, 1]} : vector<16x290xbf16> to vector<16x256xbf16>
    %37 = vector.extract_strided_slice %32 {offsets = [0, 17], sizes = [16, 256], strides = [1, 1]} : vector<16x290xbf16> to vector<16x256xbf16>
    %38 = vector.extract_strided_slice %32 {offsets = [0, 18], sizes = [16, 256], strides = [1, 1]} : vector<16x290xbf16> to vector<16x256xbf16>
    %39 = vector.extract_strided_slice %32 {offsets = [0, 32], sizes = [16, 256], strides = [1, 1]} : vector<16x290xbf16> to vector<16x256xbf16>
    %40 = vector.extract_strided_slice %32 {offsets = [0, 33], sizes = [16, 256], strides = [1, 1]} : vector<16x290xbf16> to vector<16x256xbf16>
    %41 = vector.extract_strided_slice %32 {offsets = [0, 34], sizes = [16, 256], strides = [1, 1]} : vector<16x290xbf16> to vector<16x256xbf16>
    %42 = tpu.concatenate %33, %34, %35, %36, %37, %38, %39, %40, %41 in 0 : vector<16x256xbf16>, vector<16x256xbf16>, vector<16x256xbf16>, vector<16x256xbf16>, vector<16x256xbf16>, vector<16x256xbf16>, vector<16x256xbf16>, vector<16x256xbf16>, vector<16x256xbf16> -> vector<144x256xbf16>
    %c0_19 = arith.constant 0 : index
    %c0_20 = arith.constant 0 : index
    %43 = vector.load %arg4[%c0_19, %c0_20] : memref<16x144xbf16, #tpu.memory_space<vmem>>, vector<16x144xbf16>
    %cst_21 = arith.constant dense<0.000000e+00> : vector<16x256xf32>
    %44 = tpu.matmul %43, %42, %cst_21 {dimension_numbers = #tpu.dot_dimension_numbers<[1], [0], [0], [1], [0, 0, 1, 1], [], []>} : vector<16x144xbf16>, vector<144x256xbf16>, vector<16x256xf32> -> vector<16x256xf32>
    %c0_22 = arith.constant 0 : index
    %c0_23 = arith.constant 0 : index
    %45 = vector.load %arg5[%c0_22, %c0_23] : memref<16x1xf32, #tpu.memory_space<vmem>>, vector<16x1xf32>
    %46 = vector.broadcast %45 : vector<16x1xf32> to vector<16x256xf32>
    %47 = arith.addf %44, %46 : vector<16x256xf32>
    %cst_24 = arith.constant 0.000000e+00 : f32
    %48 = vector.broadcast %cst_24 : f32 to vector<16x256xf32>
    %49 = arith.maximumf %47, %48 : vector<16x256xf32>
    %c0_25 = arith.constant 0 : index
    %c0_26 = arith.constant 0 : index
    %c0_27 = arith.constant 0 : index
    %50 = vector.load %arg6[%c0_25, %c0_26, %c0_27] : memref<1x16x256xf32, #tpu.memory_space<vmem>>, vector<1x16x256xf32>
    %51 = vector.shape_cast %50 : vector<1x16x256xf32> to vector<16x256xf32>
    %52 = vector.shape_cast %49 : vector<16x256xf32> to vector<1x16x256xf32>
    tpu.vector_store %arg6[%c0_25, %c0_26, %c0_27], %52 {strides = array<i32>} : memref<1x16x256xf32, #tpu.memory_space<vmem>>, vector<1x16x256xf32>,
    return
  }
  func.func @transform_0(%arg0: i32) -> (i32, i32, i32) {
    %c0_i32 = arith.constant 0 : i32
    %c0_i32_0 = arith.constant 0 : i32
    %c0_i32_1 = arith.constant 0 : i32
    return %arg0, %c0_i32, %c0_i32_0 : i32, i32, i32
  }
  func.func @transform_1(%arg0: i32) -> (i32, i32) {
    %c0_i32 = arith.constant 0 : i32
    %c0_i32_0 = arith.constant 0 : i32
    %c0_i32_1 = arith.constant 0 : i32
    return %c0_i32, %c0_i32_0 : i32, i32
  }
  func.func @transform_2(%arg0: i32) -> (i32, i32) {
    %c0_i32 = arith.constant 0 : i32
    %c0_i32_0 = arith.constant 0 : i32
    %c0_i32_1 = arith.constant 0 : i32
    return %c0_i32, %c0_i32_0 : i32, i32
  }
  func.func @transform_3(%arg0: i32) -> (i32, i32) {
    %c0_i32 = arith.constant 0 : i32
    %c0_i32_0 = arith.constant 0 : i32
    %c0_i32_1 = arith.constant 0 : i32
    return %c0_i32, %c0_i32_0 : i32, i32
  }
  func.func @transform_4(%arg0: i32) -> (i32, i32) {
    %c0_i32 = arith.constant 0 : i32
    %c0_i32_0 = arith.constant 0 : i32
    %c0_i32_1 = arith.constant 0 : i32
    return %c0_i32, %c0_i32_0 : i32, i32
  }
  func.func @transform_5(%arg0: i32) -> (i32, i32, i32) {
    %c0_i32 = arith.constant 0 : i32
    %c0_i32_0 = arith.constant 0 : i32
    %c0_i32_1 = arith.constant 0 : i32
    return %arg0, %c0_i32, %c0_i32_0 : i32, i32, i32
  }
}

</mosaic_0001>

<llo_original>
// kernel: down_unet2d_block.1
$region0: #{down_unet2d_block.1}
  #allocation0 [shape = 'u32[]', space=smem, size = 0x4, offset = 0x4, fixed_abs, tag = 'smem constant byte address 0x4 - core index']
  #allocation1 [shape = 'u32[144,128]{1,0:T(1,128)}', space=vmem, size = 0x12000, scoped, tag = 'internal scratch']
  #allocation2 [shape = 'bf16[1,16,290]{2,1,0:T(8,128)(2,1)}', space=vmem, size = 0x3000, scoped, tag = 'scratch operand']
  %s0 = inlined_call_operand.vmem [shape: bf16[2,8,304], index: 0, kind: input, shape index: {}]
  %s1 = inlined_call_operand.vmem [shape: bf16[16,72], index: 1, kind: input, shape index: {}]
  %s2 = inlined_call_operand.vmem [shape: f32[16,1], index: 2, kind: input, shape index: {}]
  %s3 = inlined_call_operand.vmem [shape: bf16[16,144], index: 3, kind: input, shape index: {}]
  %s4 = inlined_call_operand.vmem [shape: f32[16,1], index: 4, kind: input, shape index: {}]
  %s5 = inlined_call_operand.vmem [shape: f32[2,16,256], index: 5, kind: output, shape index: {}]
  %s6 = sld [smem:[#allocation0]]
  $region53: #{down_unet2d_block.1} parent=0
    _
  %s8 = ssub.s32 1, %s6
  %s9 = scalar_select 0, %s8, %s6
  loop: start=0, step=1, limit=4
  $region2: #{down_unet2d_block.1} parent=0 // loop_pre_header
    _
  $region3: #{down_unet2d_block.1} parent=0 // loop_header
    %s11 = sphi 0, %s15
    %p12 = scmp.ge.s32.totalorder %s11, 4
    %s21 = sphi 0, %s23
    %s24 = sphi 0, %s21
    %s25 = sphi 0, %s24
    %s41 = sphi 0, %s25
    %s45 = sphi 0, %s45
    %s47 = sphi 0, %s45
    %s48 = sphi 0, %s47
    %s62 = sphi 0, %s48
    %s66 = sphi 0, %s66
    %s68 = sphi 0, %s66
    %s69 = sphi 0, %s68
    %s83 = sphi 0, %s69
    %s87 = sphi 0, %s87
    %s89 = sphi 0, %s87
    %s90 = sphi 0, %s89
    %s104 = sphi 0, %s90
    %s108 = sphi 0, %s108
    %s110 = sphi 0, %s108
    %s111 = sphi 0, %s110
    %s125 = sphi 0, %s111
    %s131 = sphi 0, %s133
    %s134 = sphi 0, %s131
    %s135 = sphi 0, %s134
    %s151 = sphi 0, %s135
  $region4: #{down_unet2d_block.1} parent=0 // loop_header_branch
    %14 = sbr.rel (%p12) target = $region8
  $region5: #{down_unet2d_block.1} parent=0 // loop_body
    %s16 = ssub.s32 %s11, 1
    %s17 = ssub.s32 %s11, 2
    %s18 = sadd.s32 %s11, 1
    %s19 = ssub.s32 %s11, %s18
    %p20 = scmp.eq.s32.totalorder %s19, 0
    %s22 = sadd.s32 %s21, 1
    %s23 = scalar_select %p20, %s21, %s22
    %p26 = pneg %p20
    %p27 = scmp.eq.s32.totalorder %s11, 1
    %p28 = por %p26, %p27
    %p29 = scmp.ne.s32.totalorder %s21, %s24
    %p30 = scmp.eq.s32.totalorder %s11, 0
    %p31 = por %p29, %p30
    %p32 = scmp.ne.s32.totalorder %s21, %s24
    %p33 = scmp.eq.s32.totalorder %s16, 1
    %p34 = por %p32, %p33
    %p35 = scmp.ne.s32.totalorder %s24, %s25
    %p36 = scmp.eq.s32.totalorder %s16, 0
    %p37 = por %p35, %p36
    %p38 = scmp.ne.s32.totalorder %s24, %s25
    %p39 = scmp.eq.s32.totalorder %s17, 1
    %p40 = por %p38, %p39
    %p42 = scmp.ne.s32.totalorder %s25, %s41
    %p43 = scmp.eq.s32.totalorder %s17, 0
    %p44 = por %p42, %p43
    %s46 = sadd.s32 %s45, 1
    %p49 = scmp.eq.s32.totalorder %s11, 1
    %p50 = scmp.ne.s32.totalorder %s45, %s47
    %p51 = scmp.eq.s32.totalorder %s11, 0
    %p52 = por %p50, %p51
    %p53 = scmp.ne.s32.totalorder %s45, %s47
    %p54 = scmp.eq.s32.totalorder %s16, 1
    %p55 = por %p53, %p54
    %p56 = scmp.ne.s32.totalorder %s47, %s48
    %p57 = scmp.eq.s32.totalorder %s16, 0
    %p58 = por %p56, %p57
    %p59 = scmp.ne.s32.totalorder %s47, %s48
    %p60 = scmp.eq.s32.totalorder %s17, 1
    %p61 = por %p59, %p60
    %p63 = scmp.ne.s32.totalorder %s48, %s62
    %p64 = scmp.eq.s32.totalorder %s17, 0
    %p65 = por %p63, %p64
    %s67 = sadd.s32 %s66, 1
    %p70 = scmp.eq.s32.totalorder %s11, 1
    %p71 = scmp.ne.s32.totalorder %s66, %s68
    %p72 = scmp.eq.s32.totalorder %s11, 0
    %p73 = por %p71, %p72
    %p74 = scmp.ne.s32.totalorder %s66, %s68
    %p75 = scmp.eq.s32.totalorder %s16, 1
    %p76 = por %p74, %p75
    %p77 = scmp.ne.s32.totalorder %s68, %s69
    %p78 = scmp.eq.s32.totalorder %s16, 0
    %p79 = por %p77, %p78
    %p80 = scmp.ne.s32.totalorder %s68, %s69
    %p81 = scmp.eq.s32.totalorder %s17, 1
    %p82 = por %p80, %p81
    %p84 = scmp.ne.s32.totalorder %s69, %s83
    %p85 = scmp.eq.s32.totalorder %s17, 0
    %p86 = por %p84, %p85
    %s88 = sadd.s32 %s87, 1
    %p91 = scmp.eq.s32.totalorder %s11, 1
    %p92 = scmp.ne.s32.totalorder %s87, %s89
    %p93 = scmp.eq.s32.totalorder %s11, 0
    %p94 = por %p92, %p93
    %p95 = scmp.ne.s32.totalorder %s87, %s89
    %p96 = scmp.eq.s32.totalorder %s16, 1
    %p97 = por %p95, %p96
    %p98 = scmp.ne.s32.totalorder %s89, %s90
    %p99 = scmp.eq.s32.totalorder %s16, 0
    %p100 = por %p98, %p99
    %p101 = scmp.ne.s32.totalorder %s89, %s90
    %p102 = scmp.eq.s32.totalorder %s17, 1
    %p103 = por %p101, %p102
    %p105 = scmp.ne.s32.totalorder %s90, %s104
    %p106 = scmp.eq.s32.totalorder %s17, 0
    %p107 = por %p105, %p106
    %s109 = sadd.s32 %s108, 1
    %p112 = scmp.eq.s32.totalorder %s11, 1
    %p113 = scmp.ne.s32.totalorder %s108, %s110
    %p114 = scmp.eq.s32.totalorder %s11, 0
    %p115 = por %p113, %p114
    %p116 = scmp.ne.s32.totalorder %s108, %s110
    %p117 = scmp.eq.s32.totalorder %s16, 1
    %p118 = por %p116, %p117
    %p119 = scmp.ne.s32.totalorder %s110, %s111
    %p120 = scmp.eq.s32.totalorder %s16, 0
    %p121 = por %p119, %p120
    %p122 = scmp.ne.s32.totalorder %s110, %s111
    %p123 = scmp.eq.s32.totalorder %s17, 1
    %p124 = por %p122, %p123
    %p126 = scmp.ne.s32.totalorder %s111, %s125
    %p127 = scmp.eq.s32.totalorder %s17, 0
    %p128 = por %p126, %p127
    %s129 = ssub.s32 %s11, %s18
    %p130 = scmp.eq.s32.totalorder %s129, 0
    %s132 = sadd.s32 %s131, 1
    %s133 = scalar_select %p130, %s131, %s132
    %p136 = pneg %p130
    %p137 = scmp.eq.s32.totalorder %s11, 1
    %p138 = por %p136, %p137
    %p139 = scmp.ne.s32.totalorder %s131, %s134
    %p140 = scmp.eq.s32.totalorder %s11, 0
    %p141 = por %p139, %p140
    %p142 = scmp.ne.s32.totalorder %s131, %s134
    %p143 = scmp.eq.s32.totalorder %s16, 1
    %p144 = por %p142, %p143
    %p145 = scmp.ne.s32.totalorder %s134, %s135
    %p146 = scmp.eq.s32.totalorder %s16, 0
    %p147 = por %p145, %p146
    %p148 = scmp.ne.s32.totalorder %s134, %s135
    %p149 = scmp.eq.s32.totalorder %s17, 1
    %p150 = por %p148, %p149
    %p152 = scmp.ne.s32.totalorder %s135, %s151
    %p153 = scmp.eq.s32.totalorder %s17, 0
    %p154 = por %p152, %p153
    %p155 = scmp.le.s32.totalorder 1, %s11
    %p156 = scmp.lt.s32.totalorder %s11, 3
    %p157 = pnand %p155, %p156
    %p158 = pneg %p157
    // Predicated region
    $region9: #{down_unet2d_block.1} parent=5 // pred_check
      _
    $region10: #{down_unet2d_block.1} parent=5 // pred_check_branch
      %160 = sbr.rel (%p157) target = $region12
    $region11: #{down_unet2d_block.1} parent=5 // pred_region
      %s161 = ssub.s32 %s11, 1
      // Predicated region
      $region13: #{down_unet2d_block.1} parent=11 // pred_check
        %p162 = pneg %p58
      $region14: #{down_unet2d_block.1} parent=11 // pred_check_branch
        %164 = sbr.rel (%p162) target = $region16
      $region15: #{down_unet2d_block.1} parent=11 // pred_region
        _
      $region16: #{down_unet2d_block.1} parent=11 // pred_fallthru
        _
      // Predicated region
      $region17: #{down_unet2d_block.1} parent=11 // pred_check
        %p165 = pneg %p79
      $region18: #{down_unet2d_block.1} parent=11 // pred_check_branch
        %167 = sbr.rel (%p165) target = $region20
      $region19: #{down_unet2d_block.1} parent=11 // pred_region
        _
      $region20: #{down_unet2d_block.1} parent=11 // pred_fallthru
        _
      // Predicated region
      $region21: #{down_unet2d_block.1} parent=11 // pred_check
        %p168 = pneg %p100
      $region22: #{down_unet2d_block.1} parent=11 // pred_check_branch
        %170 = sbr.rel (%p168) target = $region24
      $region23: #{down_unet2d_block.1} parent=11 // pred_region
        _
      $region24: #{down_unet2d_block.1} parent=11 // pred_fallthru
        _
      // Predicated region
      $region25: #{down_unet2d_block.1} parent=11 // pred_check
        %p171 = pneg %p121
      $region26: #{down_unet2d_block.1} parent=11 // pred_check_branch
        %173 = sbr.rel (%p171) target = $region28
      $region27: #{down_unet2d_block.1} parent=11 // pred_region
        _
      $region28: #{down_unet2d_block.1} parent=11 // pred_fallthru
        _
    $region12: #{down_unet2d_block.1} parent=5 // pred_fallthru
      _
    %p174 = scmp.lt.s32.totalorder %s11, 2
    // Predicated region
    $region29: #{down_unet2d_block.1} parent=5 // pred_check
      %p175 = pneg %p174
    $region30: #{down_unet2d_block.1} parent=5 // pred_check_branch
      %177 = sbr.rel (%p175) target = $region32
    $region31: #{down_unet2d_block.1} parent=5 // pred_region
      // Predicated region
      $region33: #{down_unet2d_block.1} parent=31 // pred_check
        %p178 = pneg %p31
      $region34: #{down_unet2d_block.1} parent=31 // pred_check_branch
        %180 = sbr.rel (%p178) target = $region36
      $region35: #{down_unet2d_block.1} parent=31 // pred_region
        %p181 = scmp.lt.s32.totalorder %s11, 1
        %s182 = scalar_select %p181, %s11, 1
        %s183 = smul.addr %s182, 3
        %s184 = smul.addr %s183, 4
        %s185 = scalar_lea.vmem %s0, %s184
      $region36: #{down_unet2d_block.1} parent=31 // pred_fallthru
        _
    $region32: #{down_unet2d_block.1} parent=5 // pred_fallthru
      _
    %p186 = scmp.le.s32.totalorder 1, %s11
    %p187 = scmp.lt.s32.totalorder %s11, 3
    %p188 = pnand %p186, %p187
    %p189 = pneg %p188
    // Predicated region
    $region37: #{down_unet2d_block.1} parent=5 // pred_check
      _
    $region38: #{down_unet2d_block.1} parent=5 // pred_check_branch
      %191 = sbr.rel (%p188) target = $region40
    $region39: #{down_unet2d_block.1} parent=5 // pred_region
      %s192 = ssub.s32 %s11, 1
      %p193 = scmp.lt.s32.totalorder %s16, 1
      %s194 = scalar_select %p193, %s16, 1
      %s195 = smul.addr %s194, 3
      %s196 = smul.addr %s195, 4
      %s197 = scalar_lea.vmem %s0, %s196
      %p198 = pneg %p37
      %p199 = pneg %p34
      %p200 = pneg %p58
      %p201 = pneg %p55
      %p202 = pneg %p79
      %p203 = pneg %p76
      %p204 = pneg %p100
      %p205 = pneg %p97
      %p206 = pneg %p121
      %p207 = pneg %p118
      %p208 = pneg %p147
      %p209 = pneg %p144
      %p210 = scmp.lt.s32.totalorder %s16, 1
      %s211 = scalar_select %p210, %s16, 1
      %s212 = smul.addr %s211, 4
      %s213 = smul.addr %s212, 8
      %s214 = scalar_lea.vmem %s5, %s213
      %p215 = scmp.lt.s32.totalorder %s16, 1
      %s216 = scalar_select %p215, %s16, 1
      %s217 = smul.addr %s216, 3
      %s218 = smul.addr %s217, 4
      %s219 = scalar_lea.vmem %s0, %s218
      %p220 = scmp.lt.s32.totalorder %s16, 1
      %s221 = scalar_select %p220, %s16, 1
      %s222 = smul.addr %s221, 4
      %s223 = smul.addr %s222, 8
      %s224 = scalar_lea.vmem %s5, %s223
      %v226 = vld [vmem:[%s219] sm:$0xff]
      %v227 = vld [vmem:[%s219 + $0x8] sm:$0xf]
      %v229 = vunpack.c.l.b16 %v226
      %v230 = vunpack.c.h.b16 %v226
      %v231 = vpack.c.b16 %v229, %v229
      %v232 = vpack.c.b16 %v230, %v230
      %v234 = vunpack.c.l.b16 %v227
      %v235 = vpack.c.b16 %v234, %v234
      %236 = vrot.lane.b32.xlu0 %v231, 127
      %v237 = vpop.permute.xlu0 %236
      %238 = vrot.lane.b32.xlu0 %v232, 127
      %v239 = vpop.permute.xlu0 %238
      %240 = vrot.lane.b32.xlu0 %v235, 127
      %v241 = vpop.permute.xlu0 %240
      %vm242 = vcmask 1039360
      %v243 = vsel %vm242, %v237, %v239
      %v244 = vsel %vm242, %v239, %v241
      %245 = vrot.lane.b32.xlu0 %v231, 126
      %v246 = vpop.permute.xlu0 %245
      %247 = vrot.lane.b32.xlu0 %v232, 126
      %v248 = vpop.permute.xlu0 %247
      %249 = vrot.lane.b32.xlu0 %v235, 126
      %v250 = vpop.permute.xlu0 %249
      %vm251 = vcmask 1031168
      %v252 = vsel %vm251, %v246, %v248
      %v253 = vsel %vm251, %v248, %v250
      %254 = vrot.lane.b32.xlu0 %v231, 112
      %v255 = vpop.permute.xlu0 %254
      %256 = vrot.lane.b32.xlu0 %v232, 112
      %v257 = vpop.permute.xlu0 %256
      %258 = vrot.lane.b32.xlu0 %v235, 112
      %v259 = vpop.permute.xlu0 %258
      %vm260 = vcmask 916480
      %v261 = vsel %vm260, %v255, %v257
      %v262 = vsel %vm260, %v257, %v259
      %263 = vrot.lane.b32.xlu0 %v231, 111
      %v264 = vpop.permute.xlu0 %263
      %265 = vrot.lane.b32.xlu0 %v232, 111
      %v266 = vpop.permute.xlu0 %265
      %267 = vrot.lane.b32.xlu0 %v235, 111
      %v268 = vpop.permute.xlu0 %267
      %vm269 = vcmask 908288
      %v270 = vsel %vm269, %v264, %v266
      %v271 = vsel %vm269, %v266, %v268
      %272 = vrot.lane.b32.xlu0 %v231, 110
      %v273 = vpop.permute.xlu0 %272
      %274 = vrot.lane.b32.xlu0 %v232, 110
      %v275 = vpop.permute.xlu0 %274
      %276 = vrot.lane.b32.xlu0 %v235, 110
      %v277 = vpop.permute.xlu0 %276
      %vm278 = vcmask 900096
      %v279 = vsel %vm278, %v273, %v275
      %v280 = vsel %vm278, %v275, %v277
      %281 = vrot.lane.b32.xlu0 %v231, 96
      %v282 = vpop.permute.xlu0 %281
      %283 = vrot.lane.b32.xlu0 %v232, 96
      %v284 = vpop.permute.xlu0 %283
      %285 = vrot.lane.b32.xlu0 %v235, 96
      %v286 = vpop.permute.xlu0 %285
      %vm287 = vcmask 785408
      %v288 = vsel %vm287, %v282, %v284
      %v289 = vsel %vm287, %v284, %v286
      %290 = vrot.lane.b32.xlu0 %v231, 95
      %v291 = vpop.permute.xlu0 %290
      %292 = vrot.lane.b32.xlu0 %v232, 95
      %v293 = vpop.permute.xlu0 %292
      %294 = vrot.lane.b32.xlu0 %v235, 95
      %v295 = vpop.permute.xlu0 %294
      %vm296 = vcmask 777216
      %v297 = vsel %vm296, %v291, %v293
      %v298 = vsel %vm296, %v293, %v295
      %299 = vrot.lane.b32.xlu0 %v231, 94
      %v300 = vpop.permute.xlu0 %299
      %301 = vrot.lane.b32.xlu0 %v232, 94
      %v302 = vpop.permute.xlu0 %301
      %303 = vrot.lane.b32.xlu0 %v235, 94
      %v304 = vpop.permute.xlu0 %303
      %vm305 = vcmask 769024
      %v306 = vsel %vm305, %v300, %v302
      %v307 = vsel %vm305, %v302, %v304
      %vm308 = vcmask 1043456
      %v311 = vsel %vm308, %v231, %v243
      %v315 = vsel %vm308, %v232, %v244
      %v319 = vsel %vm308, %v252, %v261
      %v323 = vsel %vm308, %v253, %v262
      %v327 = vsel %vm308, %v270, %v279
      %v331 = vsel %vm308, %v271, %v280
      %v335 = vsel %vm308, %v288, %v297
      %v339 = vsel %vm308, %v289, %v298
      %v341 = vld [vmem:[%s1] sm:$0xf]
      %v342 = vld [vmem:[%s1 + $0x4] sm:$0xf]
      %v343 = vld [vmem:[%s2] sm:$0xff]
      %v344 = vld [vmem:[%s2 + $0x8] sm:$0xff]
      %346 = vset.pattern.permute.xlu0 0
      %347 = vperm.xlu0 %346, %v343
      %v348 = vpop.permute.xlu0 %347
      %351 = vset.pattern.permute.xlu0 0
      %352 = vperm.xlu0 %351, %v344
      %v353 = vpop.permute.xlu0 %352
      %v357 = vunpack.c.l.b16 %v341
      %v358 = vunpack.c.l.b16 %v342
      %v359 = vpack.c.b16 %v358, %v357
      %vm360 = vcmask 588800
      %v362 = vsel %vm360, %v359, 0
      %v365 = vsel %vm308, %v306, 0
      %v368 = vsel %vm308, %v307, 0
      %370 = vmatprep.subr.bf16.mxu0 0
      %371 = vmatpush1.bf16.msra.mxu0 0
      %372 = vmatprep.subr.bf16.mxu0 0
      %373 = vmatpush1.bf16.msra.mxu0 0
      %374 = vmatprep.subr.bf16.mxu0 0
      %375 = vmatpush1.bf16.msra.mxu0 0
      %376 = vmatprep.subr.bf16.mxu0 %v368
      %377 = vmatpush1.bf16.msra.mxu0 %v365
      %378 = vmatprep.subr.bf16.mxu0 %v339
      %379 = vmatpush1.bf16.msra.mxu0 %v335
      %380 = vmatprep.subr.bf16.mxu0 %v331
      %381 = vmatpush1.bf16.msra.mxu0 %v327
      %382 = vmatprep.subr.bf16.mxu0 %v323
      %383 = vmatpush1.bf16.msra.mxu0 %v319
      %384 = vmatprep.subr.bf16.mxu0 %v315
      %385 = vmatpush1.bf16.msra.mxu0 %v311
      %386 = vmatprep.subr.bf16.mxu0 0
      %387 = vmatpush2.bf16.msra.mxu0 0
      %388 = vmatprep.subr.bf16.mxu0 0
      %389 = vmatpush2.bf16.msra.mxu0 0
      %390 = vmatprep.subr.bf16.mxu0 0
      %391 = vmatpush2.bf16.msra.mxu0 0
      %392 = vmatprep.subr.bf16.mxu0 0
      %393 = vmatpush2.bf16.msra.mxu0 0
      %394 = vmatprep.subr.bf16.mxu0 0
      %395 = vmatpush2.bf16.msra.mxu0 0
      %396 = vmatprep.subr.bf16.mxu0 0
      %397 = vmatpush2.bf16.msra.mxu0 0
      %398 = vmatprep.subr.bf16.mxu0 0
      %399 = vmatpush2.bf16.msra.mxu0 0
      %400 = vmatprep.subr.bf16.mxu0 0
      %401 = vmatpush2.bf16.msra.mxu0 0
      %402 = vmatprep.mubr.bf16.mxu0 0
      %403 = vmatmul.mubr.bf16.gmra.mxu0 %v362
      %v404 = vpop.f32.mrf.mxu0
      %v405 = vadd.f32 %v348, %v404
      %v406 = vpop.f32.mrf.mxu0
      %v407 = vadd.f32 %v348, %v406
      %v408 = vpop.f32.mrf.mxu0
      %v409 = vadd.f32 %v353, %v408
      %v410 = vpop.f32.mrf.mxu0
      %v411 = vadd.f32 %v353, %v410
      %412 = vdwg.mxu0
      %v413 = vmax.f32 %v405, 0.0
      %v414 = vmax.f32 %v407, 0.0
      %v415 = vmax.f32 %v409, 0.0
      %v416 = vmax.f32 %v411, 0.0
      %v417 = vpack.c.bf16 %v415, %v413
      %v418 = vpack.c.bf16 %v416, %v414
      %vm419 = vcmask 125952
      %420 = vst.msk [vmem:[#allocation2] sm:$0xf] %vm419, 0
      %421 = vst.msk [vmem:[#allocation2 + $0xc] sm:$0xf] %vm419, 0
      %vm422 = vcmask 273536
      %423 = vst.msk [vmem:[#allocation2 + $0x8] sm:$0xf] %vm422, 0
      %424 = vst.msk [vmem:[#allocation2 + $0x14] sm:$0xf] %vm422, 0
      %v427 = vunpack.c.l.b16 %v417
      %v428 = vunpack.c.l.b16 %v418
      %v429 = vunpack.c.h.b16 %v417
      %v430 = vunpack.c.h.b16 %v418
      %v431 = vpack.c.b16 %v428, %v427
      %v432 = vpack.c.b16 %v430, %v429
      %433 = vrot.lane.b32.xlu0 %v431, 16
      %v434 = vpop.permute.xlu0 %433
      %435 = vrot.lane.b32.xlu0 %v432, 16
      %v436 = vpop.permute.xlu0 %435
      %v437 = vrot.slane %v434, 4
      %v438 = vrot.slane %v436, 4
      %vm439 = vcmask 130048
      %v440 = vsel %vm439, %v437, %v434
      %v441 = vsel %vm439, %v438, %v436
      %vm446 = vcmask 1043584
      %vm447 = vcmask 1047556
      %vm448 = vmor %vm447, %vm446
      %449 = vst.msk [vmem:[#allocation2] sm:$0xff] %vm448, %v440
      %450 = vst.msk [vmem:[#allocation2 + $0x8] sm:$0xf] %vm419, %v437
      %451 = vst.msk [vmem:[#allocation2 + $0xc] sm:$0xff] %vm448, %v441
      %452 = vst.msk [vmem:[#allocation2 + $0x14] sm:$0xf] %vm419, %v438
      %v453 = vld [vmem:[#allocation2] sm:$0xff]
      %v454 = vld [vmem:[#allocation2 + $0x8] sm:$0xf]
      %v455 = vld [vmem:[#allocation2 + $0xc] sm:$0xff]
      %v456 = vld [vmem:[#allocation2 + $0x14] sm:$0xf]
      %v459 = vunpack.c.l.b16 %v453
      %v460 = vunpack.c.h.b16 %v453
      %v461 = vunpack.c.l.b16 %v455
      %v462 = vunpack.c.h.b16 %v455
      %v463 = vpack.c.b16 %v461, %v459
      %v464 = vpack.c.b16 %v462, %v460
      %v469 = vunpack.c.l.b16 %v454
      %v470 = vunpack.c.l.b16 %v456
      %v471 = vpack.c.b16 %v470, %v469
      %472 = vrot.lane.b32.xlu0 %v463, 127
      %v473 = vpop.permute.xlu0 %472
      %474 = vrot.lane.b32.xlu0 %v464, 127
      %v475 = vpop.permute.xlu0 %474
      %476 = vrot.lane.b32.xlu0 %v471, 127
      %v477 = vpop.permute.xlu0 %476
      %v478 = vsel %vm242, %v473, %v475
      %v479 = vsel %vm242, %v475, %v477
      %482 = vrot.lane.b32.xlu0 %v463, 126
      %v483 = vpop.permute.xlu0 %482
      %484 = vrot.lane.b32.xlu0 %v464, 126
      %v485 = vpop.permute.xlu0 %484
      %486 = vrot.lane.b32.xlu0 %v471, 126
      %v487 = vpop.permute.xlu0 %486
      %v488 = vsel %vm251, %v483, %v485
      %v489 = vsel %vm251, %v485, %v487
      %492 = vrot.lane.b32.xlu0 %v463, 112
      %v493 = vpop.permute.xlu0 %492
      %494 = vrot.lane.b32.xlu0 %v464, 112
      %v495 = vpop.permute.xlu0 %494
      %496 = vrot.lane.b32.xlu0 %v471, 112
      %v497 = vpop.permute.xlu0 %496
      %v498 = vsel %vm260, %v493, %v495
      %v499 = vsel %vm260, %v495, %v497
      %502 = vrot.lane.b32.xlu0 %v463, 111
      %v503 = vpop.permute.xlu0 %502
      %504 = vrot.lane.b32.xlu0 %v464, 111
      %v505 = vpop.permute.xlu0 %504
      %506 = vrot.lane.b32.xlu0 %v471, 111
      %v507 = vpop.permute.xlu0 %506
      %v508 = vsel %vm269, %v503, %v505
      %v509 = vsel %vm269, %v505, %v507
      %512 = vrot.lane.b32.xlu0 %v463, 110
      %v513 = vpop.permute.xlu0 %512
      %514 = vrot.lane.b32.xlu0 %v464, 110
      %v515 = vpop.permute.xlu0 %514
      %516 = vrot.lane.b32.xlu0 %v471, 110
      %v517 = vpop.permute.xlu0 %516
      %v518 = vsel %vm278, %v513, %v515
      %v519 = vsel %vm278, %v515, %v517
      %522 = vrot.lane.b32.xlu0 %v463, 96
      %v523 = vpop.permute.xlu0 %522
      %524 = vrot.lane.b32.xlu0 %v464, 96
      %v525 = vpop.permute.xlu0 %524
      %526 = vrot.lane.b32.xlu0 %v471, 96
      %v527 = vpop.permute.xlu0 %526
      %v528 = vsel %vm287, %v523, %v525
      %v529 = vsel %vm287, %v525, %v527
      %532 = vrot.lane.b32.xlu0 %v463, 95
      %v533 = vpop.permute.xlu0 %532
      %534 = vrot.lane.b32.xlu0 %v464, 95
      %v535 = vpop.permute.xlu0 %534
      %536 = vrot.lane.b32.xlu0 %v471, 95
      %v537 = vpop.permute.xlu0 %536
      %v538 = vsel %vm296, %v533, %v535
      %v539 = vsel %vm296, %v535, %v537
      %542 = vrot.lane.b32.xlu0 %v463, 94
      %v543 = vpop.permute.xlu0 %542
      %544 = vrot.lane.b32.xlu0 %v464, 94
      %v545 = vpop.permute.xlu0 %544
      %546 = vrot.lane.b32.xlu0 %v471, 94
      %v547 = vpop.permute.xlu0 %546
      %v548 = vsel %vm305, %v543, %v545
      %v549 = vsel %vm305, %v545, %v547
      %v552 = vld [vmem:[%s3] sm:$0xff]
      %v553 = vld [vmem:[%s3 + $0x8] sm:$0xff]
      %v554 = vld [vmem:[%s4] sm:$0xff]
      %v555 = vld [vmem:[%s4 + $0x8] sm:$0xff]
      %557 = vset.pattern.permute.xlu0 0
      %558 = vperm.xlu0 %557, %v554
      %v559 = vpop.permute.xlu0 %558
      %562 = vset.pattern.permute.xlu0 0
      %563 = vperm.xlu0 %562, %v555
      %v564 = vpop.permute.xlu0 %563
      %v568 = vunpack.c.l.b16 %v552
      %v569 = vunpack.c.h.b16 %v552
      %v570 = vunpack.c.l.b16 %v553
      %v571 = vunpack.c.h.b16 %v553
      %v572 = vpack.c.b16 %v570, %v568
      %v573 = vpack.c.b16 %v571, %v569
      %vm575 = vcmask 130048
      %v577 = vsel %vm575, %v573, 0
      %579 = vmatprep.subr.bf16.mxu0 %v539
      %580 = vmatpush1.bf16.msra.mxu0 %v538
      %581 = vmatprep.subr.bf16.mxu0 %v529
      %582 = vmatpush1.bf16.msra.mxu0 %v528
      %583 = vmatprep.subr.bf16.mxu0 %v519
      %584 = vmatpush1.bf16.msra.mxu0 %v518
      %585 = vmatprep.subr.bf16.mxu0 %v509
      %586 = vmatpush1.bf16.msra.mxu0 %v508
      %587 = vmatprep.subr.bf16.mxu0 %v499
      %588 = vmatpush1.bf16.msra.mxu0 %v498
      %589 = vmatprep.subr.bf16.mxu0 %v489
      %590 = vmatpush1.bf16.msra.mxu0 %v488
      %591 = vmatprep.subr.bf16.mxu0 %v479
      %592 = vmatpush1.bf16.msra.mxu0 %v478
      %593 = vmatprep.subr.bf16.mxu0 %v464
      %594 = vmatpush1.bf16.msra.mxu0 %v463
      %595 = vmatprep.subr.bf16.mxu0 0
      %596 = vmatpush2.bf16.msra.mxu0 0
      %597 = vmatprep.subr.bf16.mxu0 0
      %598 = vmatpush2.bf16.msra.mxu0 0
      %599 = vmatprep.subr.bf16.mxu0 0
      %600 = vmatpush2.bf16.msra.mxu0 0
      %601 = vmatprep.subr.bf16.mxu0 0
      %602 = vmatpush2.bf16.msra.mxu0 0
      %603 = vmatprep.subr.bf16.mxu0 0
      %604 = vmatpush2.bf16.msra.mxu0 0
      %605 = vmatprep.subr.bf16.mxu0 0
      %606 = vmatpush2.bf16.msra.mxu0 0
      %607 = vmatprep.subr.bf16.mxu0 0
      %608 = vmatpush2.bf16.msra.mxu0 0
      %609 = vmatprep.subr.bf16.mxu0 %v549
      %610 = vmatpush2.bf16.msra.mxu0 %v548
      %611 = vmatprep.mubr.bf16.mxu0 %v577
      %612 = vmatmul.mubr.bf16.gmra.mxu0 %v572
      %v613 = vpop.f32.mrf.mxu0
      %v614 = vadd.f32 %v559, %v613
      %v615 = vpop.f32.mrf.mxu0
      %v616 = vadd.f32 %v559, %v615
      %v617 = vpop.f32.mrf.mxu0
      %v618 = vadd.f32 %v564, %v617
      %v619 = vpop.f32.mrf.mxu0
      %v620 = vadd.f32 %v564, %v619
      %621 = vdwg.mxu0
      %v622 = vmax.f32 %v614, 0.0
      %v623 = vmax.f32 %v616, 0.0
      %v624 = vmax.f32 %v618, 0.0
      %v625 = vmax.f32 %v620, 0.0
      %626 = vst [vmem:[%s224] sm:$0xff] %v622
      %627 = vst [vmem:[%s224 + $0x8] sm:$0xff] %v623
      %628 = vst [vmem:[%s224 + $0x10] sm:$0xff] %v624
      %629 = vst [vmem:[%s224 + $0x18] sm:$0xff] %v625
      %p630 = scmp.lt.s32.totalorder %s16, 1
      %s631 = scalar_select %p630, %s16, 1
      %s632 = smul.addr %s631, 4
      %s633 = smul.addr %s632, 8
      %s634 = scalar_lea.vmem %s5, %s633
      // Predicated region
      $region41: #{down_unet2d_block.1} parent=39 // pred_check
        %p635 = pneg %p144
      $region42: #{down_unet2d_block.1} parent=39 // pred_check_branch
        %637 = sbr.rel (%p635) target = $region44
      $region43: #{down_unet2d_block.1} parent=39 // pred_region
        _
      $region44: #{down_unet2d_block.1} parent=39 // pred_fallthru
        _
    $region40: #{down_unet2d_block.1} parent=5 // pred_fallthru
      _
    %p638 = scmp.le.s32.totalorder 2, %s11
    // Predicated region
    $region45: #{down_unet2d_block.1} parent=5 // pred_check
      %p639 = pneg %p638
    $region46: #{down_unet2d_block.1} parent=5 // pred_check_branch
      %641 = sbr.rel (%p639) target = $region48
    $region47: #{down_unet2d_block.1} parent=5 // pred_region
      %s642 = ssub.s32 %s11, 2
      // Predicated region
      $region49: #{down_unet2d_block.1} parent=47 // pred_check
        %p643 = pneg %p150
      $region50: #{down_unet2d_block.1} parent=47 // pred_check_branch
        %645 = sbr.rel (%p643) target = $region52
      $region51: #{down_unet2d_block.1} parent=47 // pred_region
        %p646 = scmp.lt.s32.totalorder %s17, 1
        %s647 = scalar_select %p646, %s17, 1
        %s648 = smul.addr %s647, 4
        %s649 = smul.addr %s648, 8
        %s650 = scalar_lea.vmem %s5, %s649
      $region52: #{down_unet2d_block.1} parent=47 // pred_fallthru
        _
    $region48: #{down_unet2d_block.1} parent=5 // pred_fallthru
      _
  $region6: #{down_unet2d_block.1} parent=0 // loop_footer
    %s15 = sadd.s32 1, %s11
  $region7: #{down_unet2d_block.1} parent=0 // loop_footer_branch
    %10 = sbr.rel target = $region3
  $region8: #{down_unet2d_block.1} parent=0 // loop_exit
    _

</llo_original>
